<compile_context>
chip_gen: v5e
topology: v5e:2x2
jax: 0.10.0
libtpu: 0.0.40
codegen_flags: <defaults>
</compile_context>

<pallas_src>
import functools

import jax
import jax.numpy as jnp
from jax.experimental import pallas as pl
from jax.experimental.pallas import tpu as pltpu

LOG_STD_MIN = -2.0
LOG_STD_MAX = 20.0

_LANE = 128          # lane width (last-dim tiling unit)
_SUBLANE = 8         # sublane width (second-to-last dim tiling unit, f32)
_MAX_TILE_B = 512    # upper bound on batch rows per grid step
# Per-step VMEM budget used to size the batch tile; leaves headroom below
# v7x's 64 MiB physical VMEM (v5e/v6e have 128 MiB).
_VMEM_BUDGET_BYTES = 44 * 1024 * 1024


def _round_up(x: int, m: int) -> int:
    return (x + m - 1) // m * m


def _cdiv(a: int, b: int) -> int:
    return -(-a // b)


# --------------------------------------------------------------------------- #
# Kernel
# --------------------------------------------------------------------------- #
def _gaussian_kernel(x_ref, w_ref, b_ref, out_ref, *, n_out: int):
    """out cols [0, n_out) = mu; cols [n_out, 2*n_out) = std = exp(clip(log_std))."""
    # Single fused GEMM for both heads; f32 accumulation on the MXU.
    y = jnp.dot(x_ref[...], w_ref[...], preferred_element_type=jnp.float32)
    y = y + b_ref[...]                                   # bias broadcast over rows
    # Lane-index mask separating the mu head from the log_std head (the split is
    # not 128-aligned anymore since the heads are packed contiguously).
    col = jax.lax.broadcasted_iota(jnp.int32, y.shape, dimension=1)
    std = jnp.exp(jnp.clip(y, LOG_STD_MIN, LOG_STD_MAX))  # VPU/EUP slots have slack
    out = jnp.where(col >= n_out, std, y)
    out_ref[...] = out.astype(out_ref.dtype)


# --------------------------------------------------------------------------- #
# One-time parameter packing (do this at init, NOT per forward call)
# --------------------------------------------------------------------------- #
def pack_gaussian_params(w_mu, b_mu, w_ls, b_ls, *, dtype=jnp.float32):
    """Pack both heads into a single lane-dense weight/bias slab.

    w_*: [n_in, n_out] (already transposed from PyTorch's [n_out, n_in]);
    b_*: [n_out] or [1, n_out].
    Returns (w_packed [n_in, n_pad], b_packed [1, n_pad], n_out) with
    n_pad = round_up(2*n_out, 128); mu head in cols [0, n_out), log_std head in
    cols [n_out, 2*n_out).
    """
    n_in, n_out = w_mu.shape
    n_pad = _round_up(2 * n_out, _LANE)
    w = jnp.zeros((n_in, n_pad), dtype)
    w = w.at[:, :n_out].set(w_mu.astype(dtype))
    w = w.at[:, n_out:2 * n_out].set(w_ls.astype(dtype))
    b = jnp.zeros((1, n_pad), jnp.float32)
    b = b.at[:, :n_out].set(jnp.reshape(b_mu, (1, n_out)).astype(jnp.float32))
    b = b.at[:, n_out:2 * n_out].set(jnp.reshape(b_ls, (1, n_out)).astype(jnp.float32))
    return w, b, n_out


# --------------------------------------------------------------------------- #
# Tile sizing
# --------------------------------------------------------------------------- #
def _choose_tile_b(B, n_in, n_pad, x_itemsize, w_itemsize):
    if B <= _SUBLANE:
        return B  # single tiny block; block dim == full array dim is always legal
    # Per-step VMEM: double-buffered x tiles + resident weights/bias + double-
    # buffered output slab.
    fixed = n_in * n_pad * w_itemsize + n_pad * 4
    per_row = 2 * n_in * x_itemsize + 2 * n_pad * 4
    fit = (_VMEM_BUDGET_BYTES - fixed) // per_row if _VMEM_BUDGET_BYTES > fixed else _SUBLANE
    tb = max(_SUBLANE, min(_MAX_TILE_B, int(fit)))
    # Give the v7x megacore (2 TCs) and the pipeliner >= 2 grid steps.
    if B >= 2 * _SUBLANE:
        tb = min(tb, _round_up(_cdiv(B, 2), _SUBLANE))
    # Never exceed the (sublane-rounded) batch.
    tb = min(tb, _round_up(B, _SUBLANE))
    return max(_SUBLANE, tb // _SUBLANE * _SUBLANE)


# --------------------------------------------------------------------------- #
# Forward wrapper
# --------------------------------------------------------------------------- #
def gaussian_from_embedding(x, w_packed, b_packed, n_out, *, compute_dtype=None):
    """x: [B, n_in]; (w_packed, b_packed, n_out) from pack_gaussian_params().

    Returns (mu, std) of the Normal distribution (f32).  For the bf16 path,
    pack the weights with dtype=jnp.bfloat16 and pass compute_dtype=jnp.bfloat16
    (only worthwhile if the x cast fuses into the upstream producer).
    """
    B, n_in = x.shape
    n_pad = w_packed.shape[1]
    if compute_dtype is not None:
        x = x.astype(compute_dtype)

    x_item = jnp.dtype(x.dtype).itemsize
    w_item = jnp.dtype(w_packed.dtype).itemsize

    tile_b = _choose_tile_b(B, n_in, n_pad, x_item, w_item)
    grid = (_cdiv(B, tile_b),)

    vmem_needed = (2 * tile_b * n_in * x_item      # x tiles (double-buffered)
                   + n_in * n_pad * w_item         # fused weights (single buffer)
                   + n_pad * 4                     # fused bias
                   + 2 * tile_b * n_pad * 4)       # output slab (double-buffered)
    vmem_limit = int(min(max(2 * vmem_needed, 4 << 20), 60 << 20))

    cost = pl.CostEstimate(
        flops=2 * B * n_in * n_pad,
        transcendentals=B * n_pad,
        bytes_accessed=(B * n_in * x_item          # x
                        + n_in * n_pad * w_item    # fused weights
                        + n_pad * 4                # bias
                        + B * n_pad * 4),          # output slab
    )

    kernel = functools.partial(_gaussian_kernel, n_out=n_out)

    out = pl.pallas_call(
        kernel,
        out_shape=jax.ShapeDtypeStruct((B, n_pad), jnp.float32),
        grid=grid,
        in_specs=[
            # x: tiled over batch, full feature dim (last dim == full array dim).
            pl.BlockSpec((tile_b, n_in), lambda i: (i, 0)),
            # Fused weights / bias: constant index_map -> resident in VMEM; a
            # single buffer is enough, so don't pay for double-buffering.
            pl.BlockSpec((n_in, n_pad), lambda i: (0, 0),
                         pipeline_mode=pl.Buffered(1)),
            pl.BlockSpec((1, n_pad), lambda i: (0, 0),
                         pipeline_mode=pl.Buffered(1)),
        ],
        # Lane-dense output slab (last dim is a multiple of 128 -> unmasked vst);
        # the last row-block may be partial -> cheap sublane-masked store.
        out_specs=pl.BlockSpec((tile_b, n_pad), lambda i: (i, 0)),
        compiler_params=pltpu.CompilerParams(
            dimension_semantics=("parallel",),   # v7x: shard batch tiles over 2 TCs
            vmem_limit_bytes=vmem_limit,
        ),
        cost_estimate=cost,
    )(x, w_packed, b_packed)

    mu = out[:, :n_out]
    std = out[:, n_out:2 * n_out]
    # TODO(synk): torch.distributions.Normal has no Pallas equivalent; callers
    # construct the distribution from (mu, std).
    return mu, std


# --------------------------------------------------------------------------- #
# Deterministic init mimicking nn.Linear default (U(-1/sqrt(n_in), 1/sqrt(n_in)))
# --------------------------------------------------------------------------- #
def init_params(key, n_in, n_out):
    k1, k2, k3, k4 = jax.random.split(key, 4)
    bound = 1.0 / jnp.sqrt(jnp.float32(n_in))
    # Stored as [n_in, n_out] (transpose of PyTorch's [n_out, n_in]).
    w_mu = jax.random.uniform(k1, (n_in, n_out), jnp.float32, -bound, bound)
    b_mu = jax.random.uniform(k2, (1, n_out), jnp.float32, -bound, bound)
    w_ls = jax.random.uniform(k3, (n_in, n_out), jnp.float32, -bound, bound)
    b_ls = jax.random.uniform(k4, (1, n_out), jnp.float32, -bound, bound)
    return w_mu, b_mu, w_ls, b_ls


if __name__ == "__main__":
    key = jax.random.PRNGKey(0)
    kx, kp = jax.random.split(key)

    n_in, n_out = 32, 16
    w_mu, b_mu, w_ls, b_ls = init_params(kp, n_in, n_out)
    # Packed ONCE at init time (not per forward call).
    w_packed, b_packed, n_out_packed = pack_gaussian_params(w_mu, b_mu, w_ls, b_ls)

    def reference(x):
        mu = x @ w_mu + b_mu
        std = jnp.exp(jnp.clip(x @ w_ls + b_ls, LOG_STD_MIN, LOG_STD_MAX))
        return mu, std

    # B=8 exercises the exact-division grid, B=50 exercises a multi-step grid
    # with a partial (row-masked) last block and the megacore split.
    for B in (8, 50):
        x = jax.random.normal(jax.random.fold_in(kx, B), (B, n_in), jnp.float32)
        mu, std = gaussian_from_embedding(x, w_packed, b_packed, n_out_packed)
        jax.block_until_ready((mu, std))

        mu_ref, std_ref = reference(x)
        assert mu.shape == (B, n_out) and std.shape == (B, n_out)
        assert jnp.allclose(mu, mu_ref, atol=1e-5), f"mu mismatch (B={B})"
        assert jnp.allclose(std, std_ref, atol=1e-5), f"std mismatch (B={B})"

    print("KERNEL_OK")
</pallas_src>

<mosaic_0001>
module attributes {stable_mosaic.version = 11 : i64} {
  func.func @_gaussian_kernel(%arg0: i32, %arg1: memref<8x32xf32, #tpu.memory_space<vmem>>, %arg2: memref<32x128xf32, #tpu.memory_space<vmem>>, %arg3: memref<1x128xf32, #tpu.memory_space<vmem>>, %arg4: memref<8x128xf32, #tpu.memory_space<vmem>>) attributes {dimension_semantics = [#tpu.dimension_semantics<parallel>], iteration_bounds = array<i64: 1>, scalar_prefetch = 0 : i64, scratch_operands = 0 : i64, tpu.core_type = #tpu.core_type<tc>, window_params = [{transform_indices = @transform_0, window_bounds = array<i64: 8, 32>}, {pipeline_mode = #tpu.pipeline_mode<synchronous>, transform_indices = @transform_1, window_bounds = array<i64: 32, 128>}, {pipeline_mode = #tpu.pipeline_mode<synchronous>, transform_indices = @transform_2, window_bounds = array<i64: 1, 128>}, {transform_indices = @transform_3, window_bounds = array<i64: 8, 128>}]} {
    %c0 = arith.constant 0 : index
    %c0_0 = arith.constant 0 : index
    %0 = vector.load %arg1[%c0, %c0_0] : memref<8x32xf32, #tpu.memory_space<vmem>>, vector<8x32xf32>
    %c0_1 = arith.constant 0 : index
    %c0_2 = arith.constant 0 : index
    %1 = vector.load %arg2[%c0_1, %c0_2] : memref<32x128xf32, #tpu.memory_space<vmem>>, vector<32x128xf32>
    %cst = arith.constant dense<0.000000e+00> : vector<8x128xf32>
    %2 = tpu.matmul %0, %1, %cst {dimension_numbers = #tpu.dot_dimension_numbers<[1], [0], [0], [1], [0, 0, 1, 1], [], []>} : vector<8x32xf32>, vector<32x128xf32>, vector<8x128xf32> -> vector<8x128xf32>
    %c0_3 = arith.constant 0 : index
    %c0_4 = arith.constant 0 : index
    %3 = vector.load %arg3[%c0_3, %c0_4] : memref<1x128xf32, #tpu.memory_space<vmem>>, vector<1x128xf32>
    %4 = vector.broadcast %3 : vector<1x128xf32> to vector<8x128xf32>
    %5 = arith.addf %2, %4 : vector<8x128xf32>
    %6 = tpu.iota {dimensions = array<i32: 1>} : vector<8x128xi32>
    %cst_5 = arith.constant -2.000000e+00 : f32
    %cst_6 = arith.constant 2.000000e+01 : f32
    %7 = vector.broadcast %cst_5 : f32 to vector<8x128xf32>
    %8 = arith.maximumf %7, %5 : vector<8x128xf32>
    %9 = vector.broadcast %cst_6 : f32 to vector<8x128xf32>
    %10 = arith.minimumf %9, %8 : vector<8x128xf32>
    %11 = math.exp %10 : vector<8x128xf32>
    %c16_i32 = arith.constant 16 : i32
    %12 = vector.broadcast %c16_i32 : i32 to vector<8x128xi32>
    %13 = arith.cmpi sge, %6, %12 : vector<8x128xi32>
    %14 = arith.select %13, %11, %5 : vector<8x128xi1>, vector<8x128xf32>
    %c0_7 = arith.constant 0 : index
    %c0_8 = arith.constant 0 : index
    %15 = vector.load %arg4[%c0_7, %c0_8] : memref<8x128xf32, #tpu.memory_space<vmem>>, vector<8x128xf32>
    tpu.vector_store %arg4[%c0_7, %c0_8], %14 {strides = array<i32>} : memref<8x128xf32, #tpu.memory_space<vmem>>, vector<8x128xf32>,
    return
  }
  func.func @transform_0(%arg0: i32) -> (i32, i32) {
    %c0_i32 = arith.constant 0 : i32
    %c0_i32_0 = arith.constant 0 : i32
    return %arg0, %c0_i32 : i32, i32
  }
  func.func @transform_1(%arg0: i32) -> (i32, i32) {
    %c0_i32 = arith.constant 0 : i32
    %c0_i32_0 = arith.constant 0 : i32
    %c0_i32_1 = arith.constant 0 : i32
    return %c0_i32, %c0_i32_0 : i32, i32
  }
  func.func @transform_2(%arg0: i32) -> (i32, i32) {
    %c0_i32 = arith.constant 0 : i32
    %c0_i32_0 = arith.constant 0 : i32
    %c0_i32_1 = arith.constant 0 : i32
    return %c0_i32, %c0_i32_0 : i32, i32
  }
  func.func @transform_3(%arg0: i32) -> (i32, i32) {
    %c0_i32 = arith.constant 0 : i32
    %c0_i32_0 = arith.constant 0 : i32
    return %arg0, %c0_i32 : i32, i32
  }
}

</mosaic_0001>

<llo_original>
// kernel: tpu_custom_call.1
$region0: #{tpu_custom_call.1}
  #allocation0 [shape = 'u32[]', space=smem, size = 0x4, offset = 0x4, fixed_abs, tag = 'smem constant byte address 0x4 - core index']
  #allocation1 [shape = 'u32[72,128]{1,0:T(1,128)}', space=vmem, size = 0x9000, scoped, tag = 'internal scratch']
  %s0 = inlined_call_operand.hbm [shape: f32[8,32], index: 0, kind: input, shape index: {}]
  %s1 = inlined_call_operand.hbm [shape: f32[32,128], index: 1, kind: input, shape index: {}]
  %s2 = inlined_call_operand.vmem [shape: f32[1,128], index: 2, kind: input, shape index: {}]
  %s3 = inlined_call_operand.hbm [shape: f32[8,128], index: 3, kind: output, shape index: {}]
  %s4 = sld [smem:[#allocation0]]
  $region30: #{tpu_custom_call.1} parent=0
    _
  %s6 = ssub.s32 1, %s4
  %s7 = scalar_select 0, %s6, %s4
  $region1: #{tpu_custom_call.1} parent=0
    #allocation2 [shape = 'u8[4096]{0}', space=vmem, size = 0x1000, scoped, tag = 'input window, operand 0, single buffered']
    #allocation3 [shape = 's32[1]{0}', space=sflag, size = 0x4, scoped, tag = 'scoped memory for tpu_custom_call.1']
    #allocation4 [shape = 's32[1]{0}', space=sflag, size = 0x4, scoped, tag = 'scoped memory for tpu_custom_call.1']
    #allocation5 [shape = 'u8[16384]{0}', space=vmem, size = 0x4000, scoped, tag = 'input window, operand 1, single buffered']
    #allocation6 [shape = 's32[1]{0}', space=sflag, size = 0x4, scoped, tag = 'scoped memory for tpu_custom_call.1']
    #allocation7 [shape = 'u8[4096]{0}', space=vmem, size = 0x1000, scoped, tag = 'output window, operand 0, single buffered']
    %8 = vsyncpa [#allocation3], 0
    %9 = vsyncpa [#allocation6], 0
    %10 = vsyncpa [#allocation4], 0
    // Predicated region
    $region2: #{tpu_custom_call.1} parent=1 // pred_check
      _
    $region3: #{tpu_custom_call.1} parent=1 // pred_check_branch
      %12 = sbr.rel (0) target = $region5
    $region4: #{tpu_custom_call.1} parent=1 // pred_region
      %14 = vsyncadd [#allocation3], 0
      %s16 = sshll.u32 %s0, 4
      %s17 = int_to_ptr.hbm [resolvable:$true] %s16
      %s18 = sshll.u32 [#allocation2], 4
      %s19 = int_to_ptr.vmem [resolvable:$true] %s18
      %21 = dma.hbm_to_vmem [thread:$0]  %s17, 128, %s19, [#allocation3]
    $region5: #{tpu_custom_call.1} parent=1 // pred_fallthru
      _
    // Predicated region
    $region6: #{tpu_custom_call.1} parent=1 // pred_check
      _
    $region7: #{tpu_custom_call.1} parent=1 // pred_check_branch
      %23 = sbr.rel (0) target = $region9
    $region8: #{tpu_custom_call.1} parent=1 // pred_region
      %25 = vsyncadd [#allocation6], 0
      %s26 = sshll.u32 %s1, 4
      %s27 = int_to_ptr.hbm [resolvable:$true] %s26
      %s28 = sshll.u32 [#allocation5], 4
      %s29 = int_to_ptr.vmem [resolvable:$true] %s28
      %34 = dma.hbm_to_vmem [thread:$0]  %s27, 512, %s29, [#allocation6], 128, 128, 8
    $region9: #{tpu_custom_call.1} parent=1 // pred_fallthru
      _
    // Predicated region
    $region10: #{tpu_custom_call.1} parent=1 // pred_check
      _
    $region11: #{tpu_custom_call.1} parent=1 // pred_check_branch
      %36 = sbr.rel (0) target = $region13
    $region12: #{tpu_custom_call.1} parent=1 // pred_region
      _
    $region13: #{tpu_custom_call.1} parent=1 // pred_fallthru
      _
    // Predicated region
    $region14: #{tpu_custom_call.1} parent=1 // pred_check
      _
    $region15: #{tpu_custom_call.1} parent=1 // pred_check_branch
      %38 = sbr.rel (0) target = $region17
    $region16: #{tpu_custom_call.1} parent=1 // pred_region
      %40 = dma.done [#allocation3], 128
    $region17: #{tpu_custom_call.1} parent=1 // pred_fallthru
      _
    // Predicated region
    $region18: #{tpu_custom_call.1} parent=1 // pred_check
      _
    $region19: #{tpu_custom_call.1} parent=1 // pred_check_branch
      %42 = sbr.rel (0) target = $region21
    $region20: #{tpu_custom_call.1} parent=1 // pred_region
      %44 = dma.done [#allocation6], 512
    $region21: #{tpu_custom_call.1} parent=1 // pred_fallthru
      _
    %v45 = vld [vmem:[#allocation2] sm:$0xff]
    %v46 = vld [vmem:[#allocation5] sm:$0xff]
    %v47 = vld [vmem:[#allocation5 + $0x8] sm:$0xff]
    %v48 = vld [vmem:[#allocation5 + $0x10] sm:$0xff]
    %v49 = vld [vmem:[#allocation5 + $0x18] sm:$0xff]
    %v50 = vld [vmem:[%s2] sm:$0x1]
    %v52 = vperm.slane %v50, 0
    %vm54 = vcmask 261120
    %v56 = vsel %vm54, %v45, 0
    %58 = vmatpush.msra.mxu0 0.0
    %59 = vmatpush.msra.mxu0 0.0
    %60 = vmatpush.msra.mxu0 0.0
    %61 = vmatpush.msra.mxu0 0.0
    %62 = vmatpush.msra.mxu0 0.0
    %63 = vmatpush.msra.mxu0 0.0
    %64 = vmatpush.msra.mxu0 0.0
    %65 = vmatpush.msra.mxu0 0.0
    %66 = vmatpush.msra.mxu0 0.0
    %67 = vmatpush.msra.mxu0 0.0
    %68 = vmatpush.msra.mxu0 0.0
    %69 = vmatpush.msra.mxu0 0.0
    %70 = vmatpush.msra.mxu0 %v49
    %71 = vmatpush.msra.mxu0 %v48
    %72 = vmatpush.msra.mxu0 %v47
    %73 = vmatpush.msra.mxu0 %v46
    %74 = vmatmul.f32.gmra.mxu0 %v56
    %v75 = vpop.f32.mrf.mxu0
    %v76 = vadd.f32 %v52, %v75
    %77 = vdwg.mxu0
    %v78 = vlaneseq
    %v79 = vand.u32 %v78, 127
    %v80 = vmax.f32 %v76, -2.0
    %v81 = vmin.f32 %v80, 20.0
    %v82 = vmul.f32 %v81, 1.442695
    %v83 = vpow.pop %v82
    %vm84 = vcmp.ge.s32.totalorder %v79, 16
    %v85 = vsel %vm84, %v83, %v76
    %86 = vst [vmem:[#allocation7] sm:$0xff] %v85
    // Predicated region
    $region22: #{tpu_custom_call.1} parent=1 // pred_check
      _
    $region23: #{tpu_custom_call.1} parent=1 // pred_check_branch
      %88 = sbr.rel (0) target = $region25
    $region24: #{tpu_custom_call.1} parent=1 // pred_region
      %90 = vsyncadd [#allocation4], 0
      %s92 = sshll.u32 [#allocation7], 4
      %s93 = int_to_ptr.vmem [resolvable:$true] %s92
      %s94 = sshll.u32 %s3, 4
      %s95 = int_to_ptr.hbm [resolvable:$true] %s94
      %97 = dma.vmem_to_hbm [thread:$0]  %s93, 128, %s95, [#allocation4]
    $region25: #{tpu_custom_call.1} parent=1 // pred_fallthru
      _
    // Predicated region
    $region26: #{tpu_custom_call.1} parent=1 // pred_check
      _
    $region27: #{tpu_custom_call.1} parent=1 // pred_check_branch
      %99 = sbr.rel (0) target = $region29
    $region28: #{tpu_custom_call.1} parent=1 // pred_region
      %101 = dma.done [#allocation4], 128
    $region29: #{tpu_custom_call.1} parent=1 // pred_fallthru
      _
    %102 = vsyncpa [#allocation3], 1
    %103 = vsyncpa [#allocation6], 1
    %104 = vsyncpa [#allocation4], 1

</llo_original>
